<compile_context>
chip_gen: v7x
topology: tpu7x:2x2x1
jax: 0.10.0
libtpu: 0.0.40
codegen_flags: <defaults>
</compile_context>

<pallas_src>
import jax
import jax.numpy as jnp
from jax.experimental import pallas as pl
from jax.experimental.pallas import tpu as pltpu


def _make_speaker_kernel(B_total, B_tile, S):
    def speaker_kernel(ids_ref, emb_ref, w_ref, b_ref, o_ref, x_ref, y_ref):
        """ids_ref: (B,) SMEM ids; emb_ref: (S, E) table; w_ref: (E, E) = W^T;
        b_ref: (1, E); o_ref: (B_tile, time_tile, E);
        x_ref/y_ref: (B_tile, E) f32 VMEM scratch."""
        bt = pl.program_id(0)
        t = pl.program_id(1)

        # Gather + ReLU + fc + softsign runs once per batch block and is
        # cached in y_ref across all time tiles (time axis is "arbitrary").
        @pl.when(t == 0)
        def _():
            @pl.loop(0, B_tile)
            def _(i):
                row = jnp.minimum(bt * B_tile + i, B_total - 1)  # ragged-tail clamp
                sid = jnp.minimum(ids_ref[row], S - 1)           # cheap OOB guard
                x_ref[pl.ds(i, 1), :] = emb_ref[pl.ds(sid, 1), :].astype(jnp.float32)

            x = jnp.maximum(x_ref[...], 0.0)                      # ReLU
            y = jnp.dot(x, w_ref[...],
                        preferred_element_type=jnp.float32) + b_ref[...]
            y_ref[...] = y / (1.0 + jnp.abs(y))                   # Softsign

        # The PyTorch unsqueeze(1).repeat(1, time, 1): broadcast the cached
        # (B_tile, E) rows into this lane-dense (B_tile, time_tile, E) slab.
        o_ref[...] = jnp.broadcast_to(
            y_ref[...][:, None, :], o_ref.shape).astype(o_ref.dtype)

    return speaker_kernel


def speaker_forward(speaker_id, emb_table, fc_w, fc_b, time,
                    *, max_block_bytes=4 * 1024 * 1024):
    """speaker_id: (B,) int; emb_table: (S, E); fc_w: (E, E) torch Linear layout
    (out, in); fc_b: (E,).  Returns (B, time, E) float32."""
    B = speaker_id.shape[0]
    S, E = emb_table.shape
    out_dtype = emb_table.dtype
    elem_bytes = jnp.dtype(out_dtype).itemsize

    # Batch blocking: up to 8 rows per output slab.
    B_tile = min(B, 8)
    n_b = pl.cdiv(B, B_tile)

    # Time tile: ~4 MiB output slabs, multiple of 8 sublanes, preferring a
    # divisor of `time` so the tail block is never a masked partial store.
    target = max(8, (max_block_bytes // (B_tile * E * elem_bytes)) // 8 * 8)
    if time <= target:
        time_tile = time                      # full extent (always legal)
    else:
        time_tile = target
        for cand in range(target, 7, -8):
            if time % cand == 0:
                time_tile = cand
                break
    n_t = pl.cdiv(time, time_tile)

    w_t = fc_w.T                              # (E_in, E_out): kernel does x @ W^T
    b_2d = fc_b.reshape(1, E)

    kernel = _make_speaker_kernel(B, B_tile, S)

    cost = pl.CostEstimate(
        flops=2 * B * E * E,
        transcendentals=0,
        bytes_accessed=B * time * E * elem_bytes
        + (S * E + E * E + E) * elem_bytes + B * 4,
    )

    return pl.pallas_call(
        kernel,
        out_shape=jax.ShapeDtypeStruct((B, time, E), out_dtype),
        grid_spec=pltpu.PrefetchScalarGridSpec(
            num_scalar_prefetch=1,
            grid=(n_b, n_t),
            in_specs=[
                pl.BlockSpec((S, E), lambda b, t, ids: (0, 0)),   # table, VMEM-resident
                pl.BlockSpec((E, E), lambda b, t, ids: (0, 0)),   # W^T, VMEM-resident
                pl.BlockSpec((1, E), lambda b, t, ids: (0, 0)),   # bias, VMEM-resident
            ],
            out_specs=pl.BlockSpec((B_tile, time_tile, E),
                                   lambda b, t, ids: (b, t, 0)),
            scratch_shapes=[
                pltpu.VMEM((B_tile, E), jnp.float32),   # gathered embeddings
                pltpu.VMEM((B_tile, E), jnp.float32),   # cached softsign(fc(...))
            ],
        ),
        compiler_params=pltpu.CompilerParams(
            # batch: "parallel" (megacore on v7x).  time: MUST be "arbitrary"
            # because y is cached in scratch across time tiles.
            dimension_semantics=("parallel", "arbitrary"),
        ),
        cost_estimate=cost,
    )(speaker_id.astype(jnp.int32), emb_table, w_t, b_2d)


def speaker_reference(speaker_id, emb_table, fc_w, fc_b, time):
    """Pure-JAX reference mirroring the PyTorch forward."""
    out = emb_table[speaker_id]                               # (B, E)
    out = jnp.maximum(out, 0.0)
    out = jnp.dot(out, fc_w.T, precision=jax.lax.Precision.HIGHEST) + fc_b
    out = jnp.repeat(out[:, None, :], time, axis=1)           # (B, T, E)
    return out / (1.0 + jnp.abs(out))                         # Softsign


if __name__ == "__main__":
    speaker_num, embedding_dim = 110, 256
    B, time = 2, 8

    key = jax.random.PRNGKey(0)
    k_id, k_emb, k_w, k_b = jax.random.split(key, 4)

    speaker_id = jax.random.randint(k_id, (B,), 0, speaker_num, dtype=jnp.int32)
    # nn.Embedding default init ~ N(0, 1); LinearNorm ~ Xavier-uniform weight,
    # nn.Linear-style uniform bias.
    emb_table = jax.random.normal(k_emb, (speaker_num, embedding_dim),
                                  dtype=jnp.float32)
    lim_w = (6.0 / (embedding_dim + embedding_dim)) ** 0.5
    lim_b = 1.0 / (embedding_dim ** 0.5)
    fc_w = jax.random.uniform(k_w, (embedding_dim, embedding_dim),
                              minval=-lim_w, maxval=lim_w, dtype=jnp.float32)
    fc_b = jax.random.uniform(k_b, (embedding_dim,),
                              minval=-lim_b, maxval=lim_b, dtype=jnp.float32)

    out = speaker_forward(speaker_id, emb_table, fc_w, fc_b, time)
    out = jax.block_until_ready(out)

    ref = speaker_reference(speaker_id, emb_table, fc_w, fc_b, time)
    assert out.shape == (B, time, embedding_dim)
    assert jnp.allclose(out, ref, atol=1e-4, rtol=1e-4), "mismatch vs reference"

    print("KERNEL_OK")
</pallas_src>

<mosaic_0001>
module attributes {stable_mosaic.version = 11 : i64} {
  func.func @speaker_kernel(%arg0: i32, %arg1: i32, %arg2: memref<2xi32, #tpu.memory_space<smem>>, %arg3: memref<110x256xf32, #tpu.memory_space<vmem>>, %arg4: memref<256x256xf32, #tpu.memory_space<vmem>>, %arg5: memref<1x256xf32, #tpu.memory_space<vmem>>, %arg6: memref<2x8x256xf32, #tpu.memory_space<vmem>>, %arg7: memref<2x256xf32, #tpu.memory_space<vmem>>, %arg8: memref<2x256xf32, #tpu.memory_space<vmem>>) attributes {dimension_semantics = [#tpu.dimension_semantics<parallel>, #tpu.dimension_semantics<arbitrary>], iteration_bounds = array<i64: 1, 1>, scalar_prefetch = 1 : i64, scratch_operands = 2 : i64, tpu.core_type = #tpu.core_type<tc>, window_params = [{pipeline_mode = #tpu.pipeline_mode<synchronous>, transform_indices = @transform_0, window_bounds = array<i64: 110, 256>}, {pipeline_mode = #tpu.pipeline_mode<synchronous>, transform_indices = @transform_1, window_bounds = array<i64: 256, 256>}, {pipeline_mode = #tpu.pipeline_mode<synchronous>, transform_indices = @transform_2, window_bounds = array<i64: 1, 256>}, {transform_indices = @transform_3, window_bounds = array<i64: 2, 8, 256>}]} {
    %c0_i32 = arith.constant 0 : i32
    %0 = arith.cmpi eq, %arg1, %c0_i32 : i32
    %1 = arith.extui %0 : i1 to i32
    %c0_i32_0 = arith.constant 0 : i32
    %2 = arith.cmpi ne, %1, %c0_i32_0 : i32
    scf.if %2 {
      %c0_i32_5 = arith.constant 0 : i32
      %c2_i32 = arith.constant 2 : i32
      %8 = arith.addi %c0_i32_5, %c2_i32 : i32
      %c1_i32 = arith.constant 1 : i32
      scf.for %arg9 = %c0_i32_5 to %8 step %c1_i32  : i32 {
        %c1_i32_17 = arith.constant 1 : i32
        %22 = arith.muli %arg9, %c1_i32_17 : i32
        %c0_i32_18 = arith.constant 0 : i32
        %23 = arith.addi %c0_i32_18, %22 : i32
        %c2_i32_19 = arith.constant 2 : i32
        %24 = arith.muli %arg0, %c2_i32_19 : i32
        %25 = arith.addi %24, %23 : i32
        %c1_i32_20 = arith.constant 1 : i32
        %26 = arith.minsi %25, %c1_i32_20 : i32
        %27 = arith.index_cast %26 : i32 to index
        %28 = memref.load %arg2[%27] : memref<2xi32, #tpu.memory_space<smem>>
        %c109_i32 = arith.constant 109 : i32
        %29 = arith.minsi %28, %c109_i32 : i32
        %30 = arith.index_cast %29 : i32 to index
        %c0_21 = arith.constant 0 : index
        %31 = vector.load %arg3[%30, %c0_21] : memref<110x256xf32, #tpu.memory_space<vmem>>, vector<1x256xf32>
        %32 = arith.index_cast %23 : i32 to index
        %c0_22 = arith.constant 0 : index
        %33 = vector.load %arg7[%32, %c0_22] : memref<2x256xf32, #tpu.memory_space<vmem>>, vector<1x256xf32>
        tpu.vector_store %arg7[%32, %c0_22], %31 {strides = array<i32>} : memref<2x256xf32, #tpu.memory_space<vmem>>, vector<1x256xf32>,
      }
      %c2_i32_6 = arith.constant 2 : i32
      %c0_7 = arith.constant 0 : index
      %c0_8 = arith.constant 0 : index
      %9 = vector.load %arg7[%c0_7, %c0_8] : memref<2x256xf32, #tpu.memory_space<vmem>>, vector<2x256xf32>
      %cst = arith.constant 0.000000e+00 : f32
      %10 = vector.broadcast %cst : f32 to vector<2x256xf32>
      %11 = arith.maximumf %9, %10 : vector<2x256xf32>
      %c0_9 = arith.constant 0 : index
      %c0_10 = arith.constant 0 : index
      %12 = vector.load %arg4[%c0_9, %c0_10] : memref<256x256xf32, #tpu.memory_space<vmem>>, vector<256x256xf32>
      %cst_11 = arith.constant dense<0.000000e+00> : vector<2x256xf32>
      %13 = tpu.matmul %11, %12, %cst_11 {dimension_numbers = #tpu.dot_dimension_numbers<[1], [0], [0], [1], [0, 0, 1, 1], [], []>} : vector<2x256xf32>, vector<256x256xf32>, vector<2x256xf32> -> vector<2x256xf32>
      %c0_12 = arith.constant 0 : index
      %c0_13 = arith.constant 0 : index
      %14 = vector.load %arg5[%c0_12, %c0_13] : memref<1x256xf32, #tpu.memory_space<vmem>>, vector<1x256xf32>
      %15 = vector.broadcast %14 : vector<1x256xf32> to vector<2x256xf32>
      %16 = arith.addf %13, %15 : vector<2x256xf32>
      %17 = math.absf %16 : vector<2x256xf32>
      %cst_14 = arith.constant 1.000000e+00 : f32
      %18 = vector.broadcast %cst_14 : f32 to vector<2x256xf32>
      %19 = arith.addf %18, %17 : vector<2x256xf32>
      %20 = arith.divf %16, %19 : vector<2x256xf32>
      %c0_15 = arith.constant 0 : index
      %c0_16 = arith.constant 0 : index
      %21 = vector.load %arg8[%c0_15, %c0_16] : memref<2x256xf32, #tpu.memory_space<vmem>>, vector<2x256xf32>
      tpu.vector_store %arg8[%c0_15, %c0_16], %20 {strides = array<i32>} : memref<2x256xf32, #tpu.memory_space<vmem>>, vector<2x256xf32>,
    } else {
    }
    %c0 = arith.constant 0 : index
    %c0_1 = arith.constant 0 : index
    %3 = vector.load %arg8[%c0, %c0_1] : memref<2x256xf32, #tpu.memory_space<vmem>>, vector<2x256xf32>
    %4 = vector.shape_cast %3 : vector<2x256xf32> to vector<2x1x256xf32>
    %5 = vector.shape_cast %4 : vector<2x1x256xf32> to vector<2x1x256xf32>
    %6 = vector.broadcast %5 : vector<2x1x256xf32> to vector<2x8x256xf32>
    %c0_2 = arith.constant 0 : index
    %c0_3 = arith.constant 0 : index
    %c0_4 = arith.constant 0 : index
    %7 = vector.load %arg6[%c0_2, %c0_3, %c0_4] : memref<2x8x256xf32, #tpu.memory_space<vmem>>, vector<2x8x256xf32>
    tpu.vector_store %arg6[%c0_2, %c0_3, %c0_4], %6 {strides = array<i32>} : memref<2x8x256xf32, #tpu.memory_space<vmem>>, vector<2x8x256xf32>,
    return
  }
  func.func @transform_0(%arg0: i32, %arg1: i32, %arg2: memref<2xi32, #tpu.memory_space<smem>>) -> (i32, i32) {
    %c0_i32 = arith.constant 0 : i32
    %c0_i32_0 = arith.constant 0 : i32
    %c0_i32_1 = arith.constant 0 : i32
    return %c0_i32, %c0_i32_0 : i32, i32
  }
  func.func @transform_1(%arg0: i32, %arg1: i32, %arg2: memref<2xi32, #tpu.memory_space<smem>>) -> (i32, i32) {
    %c0_i32 = arith.constant 0 : i32
    %c0_i32_0 = arith.constant 0 : i32
    %c0_i32_1 = arith.constant 0 : i32
    return %c0_i32, %c0_i32_0 : i32, i32
  }
  func.func @transform_2(%arg0: i32, %arg1: i32, %arg2: memref<2xi32, #tpu.memory_space<smem>>) -> (i32, i32) {
    %c0_i32 = arith.constant 0 : i32
    %c0_i32_0 = arith.constant 0 : i32
    %c0_i32_1 = arith.constant 0 : i32
    return %c0_i32, %c0_i32_0 : i32, i32
  }
  func.func @transform_3(%arg0: i32, %arg1: i32, %arg2: memref<2xi32, #tpu.memory_space<smem>>) -> (i32, i32, i32) {
    %c0_i32 = arith.constant 0 : i32
    %c0_i32_0 = arith.constant 0 : i32
    return %arg0, %arg1, %c0_i32 : i32, i32, i32
  }
}

</mosaic_0001>

<llo_original>
// kernel: tpu_custom_call.1
$region0: #{tpu_custom_call.1}
  #allocation0 [shape = 'u32[]', space=smem, size = 0x4, offset = 0x4, fixed_abs, tag = 'smem constant byte address 0x4 - core index']
  #allocation1 [shape = 'u32[144,128]{1,0:T(1,128)}', space=vmem, size = 0x12000, scoped, tag = 'internal scratch']
  #allocation2 [shape = 'f32[2,256]{1,0:T(2,128)}', space=vmem, size = 0x800, scoped, tag = 'scratch operand']
  #allocation3 [shape = 'f32[2,256]{1,0:T(2,128)}', space=vmem, size = 0x800, scoped, tag = 'scratch operand']
  #allocation4 [shape = 's32[1]{0}', space=sflag, size = 0x4, scoped, tag = 'scoped memory for tpu_custom_call.1']
  #allocation5 [shape = 'u8[512]{0}', space=smem, size = 0x200, scoped, tag = 'prefetched SMEM operand 0']
  %s0 = inlined_call_operand.hbm [shape: s32[2], index: 0, kind: input, shape index: {}]
  %s1 = inlined_call_operand.hbm [shape: f32[110,256], index: 1, kind: input, shape index: {}]
  %s2 = inlined_call_operand.hbm [shape: f32[256,256], index: 2, kind: input, shape index: {}]
  %s3 = inlined_call_operand.vmem [shape: f32[1,256], index: 3, kind: input, shape index: {}]
  %s4 = inlined_call_operand.hbm [shape: f32[2,8,256], index: 4, kind: output, shape index: {}]
  %s5 = sld [smem:[#allocation0]]
  $region41: #{tpu_custom_call.1} parent=0
    _
  %s7 = ssub.s32 1, %s5
  %s8 = scalar_select 0, %s7, %s5
  %10 = dma.hbm_to_smem %s0, 16, [#allocation5], [#allocation4]
  %11 = dma.done [#allocation4], 16
  %12 = sfence
  $region1: #{tpu_custom_call.1} parent=0
    #allocation6 [shape = 'u8[114688]{0}', space=vmem, size = 0x1c000, scoped, tag = 'input window, operand 1, single buffered']
    #allocation7 [shape = 's32[1]{0}', space=sflag, size = 0x4, scoped, tag = 'scoped memory for tpu_custom_call.1']
    #allocation8 [shape = 's32[1]{0}', space=sflag, size = 0x4, scoped, tag = 'scoped memory for tpu_custom_call.1']
    #allocation9 [shape = 'u8[262144]{0}', space=vmem, size = 0x40000, scoped, tag = 'input window, operand 2, single buffered']
    #allocation10 [shape = 's32[1]{0}', space=sflag, size = 0x4, scoped, tag = 'scoped memory for tpu_custom_call.1']
    #allocation11 [shape = 'u8[16384]{0}', space=vmem, size = 0x4000, scoped, tag = 'output window, operand 0, single buffered']
    %13 = vsyncpa [#allocation7], 0
    %14 = vsyncpa [#allocation10], 0
    %15 = vsyncpa [#allocation8], 0
    // Predicated region
    $region2: #{tpu_custom_call.1} parent=1 // pred_check
      _
    $region3: #{tpu_custom_call.1} parent=1 // pred_check_branch
      %17 = sbr.rel (0) target = $region5
    $region4: #{tpu_custom_call.1} parent=1 // pred_region
      %s19 = ssub.s32 3584, 3584
      %20 = vsyncadd [#allocation7], %s19
      %s21 = sshll.u32 [#allocation6], 4
      %s22 = int_to_ptr.vmem [resolvable:$true] %s21
      %27 = dma.hbm_to_vmem [thread:$0]  %s1, 3584, %s22, [#allocation7], 256, 256, 16
    $region5: #{tpu_custom_call.1} parent=1 // pred_fallthru
      _
    // Predicated region
    $region6: #{tpu_custom_call.1} parent=1 // pred_check
      _
    $region7: #{tpu_custom_call.1} parent=1 // pred_check_branch
      %29 = sbr.rel (0) target = $region9
    $region8: #{tpu_custom_call.1} parent=1 // pred_region
      %s31 = ssub.s32 8192, 8192
      %32 = vsyncadd [#allocation10], %s31
      %s33 = sshll.u32 [#allocation9], 4
      %s34 = int_to_ptr.vmem [resolvable:$true] %s33
      %39 = dma.hbm_to_vmem [thread:$0]  %s2, 8192, %s34, [#allocation10], 256, 256, 16
    $region9: #{tpu_custom_call.1} parent=1 // pred_fallthru
      _
    // Predicated region
    $region10: #{tpu_custom_call.1} parent=1 // pred_check
      _
    $region11: #{tpu_custom_call.1} parent=1 // pred_check_branch
      %41 = sbr.rel (0) target = $region13
    $region12: #{tpu_custom_call.1} parent=1 // pred_region
      _
    $region13: #{tpu_custom_call.1} parent=1 // pred_fallthru
      _
    // Predicated region
    $region14: #{tpu_custom_call.1} parent=1 // pred_check
      _
    $region15: #{tpu_custom_call.1} parent=1 // pred_check_branch
      %43 = sbr.rel (0) target = $region17
    $region16: #{tpu_custom_call.1} parent=1 // pred_region
      %44 = dma.done [#allocation7], 3584
    $region17: #{tpu_custom_call.1} parent=1 // pred_fallthru
      _
    // Predicated region
    $region18: #{tpu_custom_call.1} parent=1 // pred_check
      _
    $region19: #{tpu_custom_call.1} parent=1 // pred_check_branch
      %46 = sbr.rel (0) target = $region21
    $region20: #{tpu_custom_call.1} parent=1 // pred_region
      %47 = dma.done [#allocation10], 8192
    $region21: #{tpu_custom_call.1} parent=1 // pred_fallthru
      _
    %p48 = scmp.eq.s32.totalorder 0, 0
    // Predicated region
    $region22: #{tpu_custom_call.1} parent=1 // pred_check
      %p49 = pneg %p48
    $region23: #{tpu_custom_call.1} parent=1 // pred_check_branch
      %51 = sbr.rel (%p49) target = $region25
    $region24: #{tpu_custom_call.1} parent=1 // pred_region
      loop: start=0, step=1, limit=2
      $region26: #{tpu_custom_call.1} parent=24 // loop_pre_header
        _
      $region27: #{tpu_custom_call.1} parent=24 // loop_header
        %s53 = sphi 0, %s57
        %p54 = scmp.ge.s32.totalorder %s53, 2
      $region28: #{tpu_custom_call.1} parent=24 // loop_header_branch
        %56 = sbr.rel (%p54) target = $region32
      $region29: #{tpu_custom_call.1} parent=24 // loop_body
        %s58 = smul.u32 0, 2
        %s59 = sadd.s32 %s58, %s53
        %p60 = scmp.lt.s32.totalorder %s59, 1
        %s61 = scalar_select %p60, %s59, 1
        %s62 = sld [smem:[#allocation5 + %s61]]
        %p63 = scmp.lt.s32.totalorder %s62, 109
        %s64 = scalar_select %p63, %s62, 109
        %s65 = sshra.s32 %s64, 3
        %s66 = sand.u32 %s64, 7
        %s67 = sshra.s32 %s64, 3
        %s68 = sand.u32 %s64, 7
        %s69 = smul.u32 %s65, 2
        %s70 = smul.u32 %s69, 8
        %s71 = sadd.s32 %s70, %s68
        %s72 = scalar_lea.vmem [#allocation6], %s71
        %v73 = vld [vmem:[%s72] ss:$8 sm:$0x3]
        %v74 = vlaneseq
        %vm75 = vcmp.ge.s32.totalorder %v74, 0
        %vm76 = vcmp.lt.s32.totalorder %v74, 256
        %vm77 = vmand %vm75, %vm76
        %s78 = sshra.s32 %s53, 1
        %s79 = sand.u32 %s53, 1
        %s80 = sshra.s32 %s53, 1
        %s81 = sand.u32 %s53, 1
        %s82 = smul.u32 %s78, 2
        %s83 = smul.u32 %s82, 2
        %s84 = sadd.s32 %s83, %s81
        %s85 = scalar_lea.vmem [#allocation2], %s84
        %86 = vst.msk [vmem:[%s85] ss:$2 sm:$0x3] %vm77, %v73
      $region30: #{tpu_custom_call.1} parent=24 // loop_footer
        %s57 = sadd.s32 1, %s53
      $region31: #{tpu_custom_call.1} parent=24 // loop_footer_branch
        %52 = sbr.rel target = $region27
      $region32: #{tpu_custom_call.1} parent=24 // loop_exit
        _
      %v87 = vld [vmem:[#allocation2] sm:$0xf]
      %v88 = vmax.f32 %v87, 0.0
      %v89 = vld [vmem:[#allocation9] sm:$0xff]
      %v90 = vld [vmem:[#allocation9 + $0x8] sm:$0xff]
      %v91 = vld [vmem:[#allocation9 + $0x10] sm:$0xff]
      %v92 = vld [vmem:[#allocation9 + $0x18] sm:$0xff]
      %v93 = vld [vmem:[#allocation9 + $0x20] sm:$0xff]
      %v94 = vld [vmem:[#allocation9 + $0x28] sm:$0xff]
      %v95 = vld [vmem:[#allocation9 + $0x30] sm:$0xff]
      %v96 = vld [vmem:[#allocation9 + $0x38] sm:$0xff]
      %v97 = vld [vmem:[#allocation9 + $0x40] sm:$0xff]
      %v98 = vld [vmem:[#allocation9 + $0x48] sm:$0xff]
      %v99 = vld [vmem:[#allocation9 + $0x50] sm:$0xff]
      %v100 = vld [vmem:[#allocation9 + $0x58] sm:$0xff]
      %v101 = vld [vmem:[#allocation9 + $0x60] sm:$0xff]
      %v102 = vld [vmem:[#allocation9 + $0x68] sm:$0xff]
      %v103 = vld [vmem:[#allocation9 + $0x70] sm:$0xff]
      %v104 = vld [vmem:[#allocation9 + $0x78] sm:$0xff]
      %v105 = vld [vmem:[#allocation9 + $0x80] sm:$0xff]
      %v106 = vld [vmem:[#allocation9 + $0x88] sm:$0xff]
      %v107 = vld [vmem:[#allocation9 + $0x90] sm:$0xff]
      %v108 = vld [vmem:[#allocation9 + $0x98] sm:$0xff]
      %v109 = vld [vmem:[#allocation9 + $0xa0] sm:$0xff]
      %v110 = vld [vmem:[#allocation9 + $0xa8] sm:$0xff]
      %v111 = vld [vmem:[#allocation9 + $0xb0] sm:$0xff]
      %v112 = vld [vmem:[#allocation9 + $0xb8] sm:$0xff]
      %v113 = vld [vmem:[#allocation9 + $0xc0] sm:$0xff]
      %v114 = vld [vmem:[#allocation9 + $0xc8] sm:$0xff]
      %v115 = vld [vmem:[#allocation9 + $0xd0] sm:$0xff]
      %v116 = vld [vmem:[#allocation9 + $0xd8] sm:$0xff]
      %v117 = vld [vmem:[#allocation9 + $0xe0] sm:$0xff]
      %v118 = vld [vmem:[#allocation9 + $0xe8] sm:$0xff]
      %v119 = vld [vmem:[#allocation9 + $0xf0] sm:$0xff]
      %v120 = vld [vmem:[#allocation9 + $0xf8] sm:$0xff]
      %v121 = vld [vmem:[#allocation9 + $0x100] sm:$0xff]
      %v122 = vld [vmem:[#allocation9 + $0x108] sm:$0xff]
      %v123 = vld [vmem:[#allocation9 + $0x110] sm:$0xff]
      %v124 = vld [vmem:[#allocation9 + $0x118] sm:$0xff]
      %v125 = vld [vmem:[#allocation9 + $0x120] sm:$0xff]
      %v126 = vld [vmem:[#allocation9 + $0x128] sm:$0xff]
      %v127 = vld [vmem:[#allocation9 + $0x130] sm:$0xff]
      %v128 = vld [vmem:[#allocation9 + $0x138] sm:$0xff]
      %v129 = vld [vmem:[#allocation9 + $0x140] sm:$0xff]
      %v130 = vld [vmem:[#allocation9 + $0x148] sm:$0xff]
      %v131 = vld [vmem:[#allocation9 + $0x150] sm:$0xff]
      %v132 = vld [vmem:[#allocation9 + $0x158] sm:$0xff]
      %v133 = vld [vmem:[#allocation9 + $0x160] sm:$0xff]
      %v134 = vld [vmem:[#allocation9 + $0x168] sm:$0xff]
      %v135 = vld [vmem:[#allocation9 + $0x170] sm:$0xff]
      %v136 = vld [vmem:[#allocation9 + $0x178] sm:$0xff]
      %v137 = vld [vmem:[#allocation9 + $0x180] sm:$0xff]
      %v138 = vld [vmem:[#allocation9 + $0x188] sm:$0xff]
      %v139 = vld [vmem:[#allocation9 + $0x190] sm:$0xff]
      %v140 = vld [vmem:[#allocation9 + $0x198] sm:$0xff]
      %v141 = vld [vmem:[#allocation9 + $0x1a0] sm:$0xff]
      %v142 = vld [vmem:[#allocation9 + $0x1a8] sm:$0xff]
      %v143 = vld [vmem:[#allocation9 + $0x1b0] sm:$0xff]
      %v144 = vld [vmem:[#allocation9 + $0x1b8] sm:$0xff]
      %v145 = vld [vmem:[#allocation9 + $0x1c0] sm:$0xff]
      %v146 = vld [vmem:[#allocation9 + $0x1c8] sm:$0xff]
      %v147 = vld [vmem:[#allocation9 + $0x1d0] sm:$0xff]
      %v148 = vld [vmem:[#allocation9 + $0x1d8] sm:$0xff]
      %v149 = vld [vmem:[#allocation9 + $0x1e0] sm:$0xff]
      %v150 = vld [vmem:[#allocation9 + $0x1e8] sm:$0xff]
      %v151 = vld [vmem:[#allocation9 + $0x1f0] sm:$0xff]
      %v152 = vld [vmem:[#allocation9 + $0x1f8] sm:$0xff]
      %v153 = vld [vmem:[%s3] sm:$0x3]
      %v155 = vlaneseq
      %v156 = vshrl.u32 %v155, 7
      %v157 = vsub.s32 0, %v156
      %v158 = vrot.slane %v153, %v157
      %v159 = vlaneseq
      %v160 = vshrl.u32 %v159, 7
      %v161 = vsub.s32 1, %v160
      %v162 = vrot.slane %v153, %v161
      %v167 = vunpack.c.l.s4 1983009808
      %v168 = vunpack.c.0.s8 %v167
      %v169 = vlaneseq
      %v170 = vshrl.u32 %v169, 7
      %v171 = vsub.s32 %v168, %v170
      %v172 = vrot.slane %v88, %v171
      %v173 = vcombine.high %v172, %v172
      %176 = vmatprep.subr.mxu0 %v90
      %177 = vmatpush1.msra.mxu0 %v89
      %178 = vmatprep.subr.mxu0 %v92
      %179 = vmatpush1.msra.mxu0 %v91
      %180 = vmatprep.subr.mxu0 %v94
      %181 = vmatpush1.msra.mxu0 %v93
      %182 = vmatprep.subr.mxu0 %v96
      %183 = vmatpush1.msra.mxu0 %v95
      %184 = vmatprep.subr.mxu0 %v98
      %185 = vmatpush1.msra.mxu0 %v97
      %186 = vmatprep.subr.mxu0 %v100
      %187 = vmatpush1.msra.mxu0 %v99
      %188 = vmatprep.subr.mxu0 %v102
      %189 = vmatpush1.msra.mxu0 %v101
      %190 = vmatprep.subr.mxu0 %v104
      %191 = vmatpush1.msra.mxu0 %v103
      %192 = vmatprep.subr.mxu0 %v106
      %193 = vmatpush1.msra.mxu0 %v105
      %194 = vmatprep.subr.mxu0 %v108
      %195 = vmatpush1.msra.mxu0 %v107
      %196 = vmatprep.subr.mxu0 %v110
      %197 = vmatpush1.msra.mxu0 %v109
      %198 = vmatprep.subr.mxu0 %v112
      %199 = vmatpush1.msra.mxu0 %v111
      %200 = vmatprep.subr.mxu0 %v114
      %201 = vmatpush1.msra.mxu0 %v113
      %202 = vmatprep.subr.mxu0 %v116
      %203 = vmatpush1.msra.mxu0 %v115
      %204 = vmatprep.subr.mxu0 %v118
      %205 = vmatpush1.msra.mxu0 %v117
      %206 = vmatprep.subr.mxu0 %v120
      %207 = vmatpush1.msra.mxu0 %v119
      %208 = vmatprep.subr.mxu0 %v122
      %209 = vmatpush1.msra.mxu0 %v121
      %210 = vmatprep.subr.mxu0 %v124
      %211 = vmatpush1.msra.mxu0 %v123
      %212 = vmatprep.subr.mxu0 %v126
      %213 = vmatpush1.msra.mxu0 %v125
      %214 = vmatprep.subr.mxu0 %v128
      %215 = vmatpush1.msra.mxu0 %v127
      %216 = vmatprep.subr.mxu0 %v130
      %217 = vmatpush1.msra.mxu0 %v129
      %218 = vmatprep.subr.mxu0 %v132
      %219 = vmatpush1.msra.mxu0 %v131
      %220 = vmatprep.subr.mxu0 %v134
      %221 = vmatpush1.msra.mxu0 %v133
      %222 = vmatprep.subr.mxu0 %v136
      %223 = vmatpush1.msra.mxu0 %v135
      %224 = vmatprep.subr.mxu0 %v138
      %225 = vmatpush1.msra.mxu0 %v137
      %226 = vmatprep.subr.mxu0 %v140
      %227 = vmatpush1.msra.mxu0 %v139
      %228 = vmatprep.subr.mxu0 %v142
      %229 = vmatpush1.msra.mxu0 %v141
      %230 = vmatprep.subr.mxu0 %v144
      %231 = vmatpush1.msra.mxu0 %v143
      %232 = vmatprep.subr.mxu0 %v146
      %233 = vmatpush1.msra.mxu0 %v145
      %234 = vmatprep.subr.mxu0 %v148
      %235 = vmatpush1.msra.mxu0 %v147
      %236 = vmatprep.subr.mxu0 %v150
      %237 = vmatpush1.msra.mxu0 %v149
      %238 = vmatprep.subr.mxu0 %v152
      %239 = vmatpush1.msra.mxu0 %v151
      %240 = vmatprep.mubr.f32.mxu0 %v173
      %241 = vmatmul.mubr.f32.gmra.mrb[0].mxu0 %v172
      %v242 = vpop.f32.mrb[0].mxu0
      %v243 = vadd.f32 %v158, %v242
      %v244 = vpop.f32.mrb[0].mxu0
      %v245 = vadd.f32 %v162, %v244
      %246 = vdwg.mxu0
      %v247 = vand.u32 2147483647, %v243
      %v248 = vand.u32 2147483647, %v245
      %v249 = vadd.f32 %v247, 1.0
      %v250 = vadd.f32 %v248, 1.0
      %v251 = vrcp.pop %v249
      %v252 = vmul.f32 %v243, %v251
      %v253 = vrcp.pop %v250
      %v254 = vmul.f32 %v245, %v253
      %v257 = vcombine.low %v252, %v254
      %v259 = vunpack.c.l.s4 1983009808
      %v260 = vunpack.c.0.s8 %v259
      %v261 = vlaneseq
      %v262 = vshrl.u32 %v261, 7
      %v263 = vsub.s32 %v260, %v262
      %v264 = vrot.slane %v257, %v263
      %266 = vst [vmem:[#allocation3] sm:$0xf] %v264
    $region25: #{tpu_custom_call.1} parent=1 // pred_fallthru
      _
    %v267 = vld [vmem:[#allocation3] sm:$0xf]
    %v270 = vunpack.c.l.s4 1966171168
    %v271 = vunpack.c.0.s8 %v270
    %v272 = vlaneseq
    %v273 = vshrl.u32 %v272, 7
    %v274 = vsub.s32 %v271, %v273
    %v275 = vrot.slane %v267, %v274
    %v276 = vcombine.high %v275, %v275
    %v277 = vlaneseq
    %v278 = vshrl.u32 %v277, 7
    %v279 = vsub.s32 0, %v278
    %v280 = vrot.slane %v275, %v279
    %v281 = vlaneseq
    %v282 = vshrl.u32 %v281, 7
    %v283 = vsub.s32 1, %v282
    %v284 = vrot.slane %v275, %v283
    %v285 = vlaneseq
    %v286 = vshrl.u32 %v285, 7
    %v287 = vsub.s32 0, %v286
    %v288 = vrot.slane %v276, %v287
    %v289 = vlaneseq
    %v290 = vshrl.u32 %v289, 7
    %v291 = vsub.s32 1, %v290
    %v292 = vrot.slane %v276, %v291
    %297 = vst [vmem:[#allocation11] sm:$0xff] %v280
    %298 = vst [vmem:[#allocation11 + $0x8] sm:$0xff] %v284
    %299 = vst [vmem:[#allocation11 + $0x10] sm:$0xff] %v288
    %300 = vst [vmem:[#allocation11 + $0x18] sm:$0xff] %v292
    // Predicated region
    $region33: #{tpu_custom_call.1} parent=1 // pred_check
      _
    $region34: #{tpu_custom_call.1} parent=1 // pred_check_branch
      %302 = sbr.rel (0) target = $region36
    $region35: #{tpu_custom_call.1} parent=1 // pred_region
      %s304 = ssub.s32 512, 512
      %305 = vsyncadd [#allocation8], %s304
      %s306 = sshll.u32 [#allocation11], 4
      %s307 = int_to_ptr.vmem [resolvable:$true] %s306
      %312 = dma.vmem_to_hbm [thread:$0]  %s307, 512, %s4, [#allocation8], 256, 256, 16
    $region36: #{tpu_custom_call.1} parent=1 // pred_fallthru
      _
    // Predicated region
    $region37: #{tpu_custom_call.1} parent=1 // pred_check
      _
    $region38: #{tpu_custom_call.1} parent=1 // pred_check_branch
      %314 = sbr.rel (0) target = $region40
    $region39: #{tpu_custom_call.1} parent=1 // pred_region
      %315 = dma.done [#allocation8], 512
    $region40: #{tpu_custom_call.1} parent=1 // pred_fallthru
      _
    %316 = vsyncpa [#allocation7], 1
    %317 = vsyncpa [#allocation10], 1
    %318 = vsyncpa [#allocation8], 1

</llo_original>
